<compile_context>
chip_gen: v6e
topology: v6e:2x2x1
jax: 0.10.0
libtpu: 0.0.40
codegen_flags: <defaults>
</compile_context>

<pallas_src>
import jax
import jax.numpy as jnp
from jax.experimental import pallas as pl
from jax.experimental.pallas import tpu as pltpu


def _happy_kernel(x_ref, o_ref):
    # Elementwise hot path: output = input + 1 (dtype-exact constant).
    o_ref[...] = x_ref[...] + jnp.asarray(1, dtype=x_ref.dtype)


def _tpu_budget():
    """Return (block_byte_cap, vmem_limit_bytes), generation aware.

    v5e/v6e have 128 MiB physical VMEM -> big blocks are free.
    v7x has 64 MiB per TensorCore -> keep 4x block (in+out, double-buffered)
    comfortably under the limit.  Unknown backends get a safe default.
    """
    try:
        info = pltpu.get_tpu_info()
        vmem = int(getattr(info, "vmem_capacity_bytes", 0) or 0)
    except Exception:  # pragma: no cover - e.g. interpret mode / old jax
        vmem = 0
    if vmem >= 100 * 1024 * 1024:          # v5e / v6e (128 MiB VMEM)
        return 8 * 1024 * 1024, 64 * 1024 * 1024
    if vmem > 0:                            # v7x (64 MiB VMEM per TC)
        return 6 * 1024 * 1024, 40 * 1024 * 1024
    return 4 * 1024 * 1024, 32 * 1024 * 1024


# Lane-dense candidates (largest first).  Must divide n exactly so the
# reshape is a bitcast (no pad, no tail slice, no extra HBM traffic).
_LANE_CANDIDATES = (1024, 512, 256, 128)


def happy_forward(x: jax.Array) -> jax.Array:
    """Pallas equivalent of Happy.forward: returns x + 1 (same shape/dtype)."""
    orig_shape, dtype = x.shape, x.dtype
    n = x.size
    itemsize = jnp.dtype(dtype).itemsize

    # Pick lane = largest 128-multiple divisor of n, preferring >= 8 rows so
    # the (sublane, lane) tile is well shaped.
    lane = 0
    for cand in _LANE_CANDIDATES:
        if n % cand == 0 and n // cand >= 8:
            lane = cand
            break
    if lane == 0:
        for cand in _LANE_CANDIDATES:
            if n % cand == 0:
                lane = cand
                break

    if n == 0 or lane == 0:
        # No 128-multiple factor of n (never happens for typical NCHW
        # activations) -> plain XLA add; still exact, avoids pad/slice traffic.
        return x + jnp.asarray(1, dtype=dtype)

    rows = n // lane
    # Sublane packing: 8 rows for 32-bit, 16 for bf16, 32 for int8/fp8.
    sub = max(8, 32 // itemsize)

    block_cap_bytes, vmem_limit = _tpu_budget()
    rows_cap = max(sub, (block_cap_bytes // (lane * itemsize)) // sub * sub)
    n_blocks = pl.cdiv(rows, rows_cap)

    # On inputs big enough to care (>= 2 MiB) make sure there are at least two
    # blocks and an even count, so v7x's two TensorCores split the "parallel"
    # grid axis evenly (no-op on single-TC v5e/v6e).
    if rows > sub and n * itemsize >= 2 * 1024 * 1024:
        if n_blocks < 2:
            n_blocks = 2
        elif n_blocks % 2:
            n_blocks += 1

    block_rows = min(rows, pl.cdiv(pl.cdiv(rows, n_blocks), sub) * sub)
    n_blocks = pl.cdiv(rows, block_rows)   # last block may be partial; Pallas masks it

    x2d = x.reshape(rows, lane)            # pure bitcast: n == rows * lane

    out2d = pl.pallas_call(
        _happy_kernel,
        out_shape=jax.ShapeDtypeStruct((rows, lane), dtype),
        grid=(n_blocks,),
        in_specs=[pl.BlockSpec((block_rows, lane), lambda i: (i, 0))],
        out_specs=pl.BlockSpec((block_rows, lane), lambda i: (i, 0)),
        # Output reuses the input HBM buffer (each block reads itself before
        # writing itself).  Free when this op sits inside a larger jitted
        # graph where the input dies here.
        input_output_aliases={0: 0},
        # Accurate pure-bandwidth cost hint for XLA's scheduler.
        cost_estimate=pl.CostEstimate(
            flops=n, transcendentals=0, bytes_accessed=2 * n * itemsize),
        compiler_params=pltpu.CompilerParams(
            dimension_semantics=("parallel",),
            vmem_limit_bytes=vmem_limit,
        ),
    )(x2d)

    return out2d.reshape(orig_shape)


# Below this size, kernel-launch + per-step overhead dwarfs the data movement;
# plain XLA `x + 1` fuses into neighbors for free.
_PALLAS_MIN_ELEMS = 64 * 1024


def happy(x: jax.Array) -> jax.Array:
    """Production entry point with a tiny-input fast path."""
    if x.size < _PALLAS_MIN_ELEMS:
        return x + jnp.asarray(1, dtype=x.dtype)
    return happy_forward(x)


if __name__ == "__main__":
    key = jax.random.PRNGKey(0)
    k1, k2, k3 = jax.random.split(key, 3)

    # Small NCHW image-like input: batch=2, channels=4, spatial=16x16.
    # n = 2048 -> lane=256, rows=8, single (8, 256) block, no padding.
    x_small = jax.random.normal(k1, (2, 4, 16, 16), dtype=jnp.float32)
    out_small = jax.block_until_ready(happy_forward(x_small))
    assert out_small.shape == x_small.shape and out_small.dtype == x_small.dtype
    assert jnp.array_equal(out_small, x_small + 1.0)

    # Larger input to exercise the multi-block, double-buffered, 2-TC-balanced
    # pipeline path (lane=1024, grid of >= 2 even blocks, no padding).
    x_big = jax.random.normal(k2, (8, 8, 128, 128), dtype=jnp.float32)
    out_big = jax.block_until_ready(happy_forward(x_big))
    assert out_big.shape == x_big.shape and out_big.dtype == x_big.dtype
    assert jnp.array_equal(out_big, x_big + 1.0)

    # bf16 path (exercises the 16-row sublane packing rule).
    x_bf16 = jax.random.normal(k3, (2, 4, 16, 16), dtype=jnp.bfloat16)
    out_bf16 = jax.block_until_ready(happy_forward(x_bf16))
    assert out_bf16.dtype == jnp.bfloat16
    assert jnp.array_equal(out_bf16, x_bf16 + jnp.asarray(1, jnp.bfloat16))

    # Dispatcher: tiny inputs stay in plain XLA per perf guidance.
    out_disp = jax.block_until_ready(happy(x_small))
    assert jnp.array_equal(out_disp, x_small + 1.0)

    print("KERNEL_OK")
</pallas_src>

<mosaic_0001>
module attributes {stable_mosaic.version = 11 : i64} {
  func.func @_happy_kernel(%arg0: i32, %arg1: memref<8x256xf32, #tpu.memory_space<vmem>>, %arg2: memref<8x256xf32, #tpu.memory_space<vmem>>) attributes {dimension_semantics = [#tpu.dimension_semantics<parallel>], iteration_bounds = array<i64: 1>, scalar_prefetch = 0 : i64, scratch_operands = 0 : i64, tpu.core_type = #tpu.core_type<tc>, window_params = [{transform_indices = @transform_0, window_bounds = array<i64: 8, 256>}, {transform_indices = @transform_1, window_bounds = array<i64: 8, 256>}]} {
    %c0 = arith.constant 0 : index
    %c0_0 = arith.constant 0 : index
    %0 = vector.load %arg1[%c0, %c0_0] : memref<8x256xf32, #tpu.memory_space<vmem>>, vector<8x256xf32>
    %cst = arith.constant 1.000000e+00 : f32
    %1 = vector.broadcast %cst : f32 to vector<8x256xf32>
    %2 = arith.addf %0, %1 : vector<8x256xf32>
    %c0_1 = arith.constant 0 : index
    %c0_2 = arith.constant 0 : index
    %3 = vector.load %arg2[%c0_1, %c0_2] : memref<8x256xf32, #tpu.memory_space<vmem>>, vector<8x256xf32>
    tpu.vector_store %arg2[%c0_1, %c0_2], %2 {strides = array<i32>} : memref<8x256xf32, #tpu.memory_space<vmem>>, vector<8x256xf32>,
    return
  }
  func.func @transform_0(%arg0: i32) -> (i32, i32) {
    %c0_i32 = arith.constant 0 : i32
    %c0_i32_0 = arith.constant 0 : i32
    return %arg0, %c0_i32 : i32, i32
  }
  func.func @transform_1(%arg0: i32) -> (i32, i32) {
    %c0_i32 = arith.constant 0 : i32
    %c0_i32_0 = arith.constant 0 : i32
    return %arg0, %c0_i32 : i32, i32
  }
}

</mosaic_0001>

<llo_original>
// kernel: tpu_custom_call.1
$region0: #{tpu_custom_call.1}
  #allocation0 [shape = 'u32[]', space=smem, size = 0x4, offset = 0x4, fixed_abs, tag = 'smem constant byte address 0x4 - core index']
  #allocation1 [shape = 'u32[144,128]{1,0:T(1,128)}', space=vmem, size = 0x12000, scoped, tag = 'internal scratch']
  %s0 = inlined_call_operand.hbm [shape: f32[8,256], index: 0, kind: input, shape index: {}, may-alias: {0,1}]
  %s1 = inlined_call_operand.hbm [shape: f32[8,256], index: 1, kind: output, shape index: {}, may-alias: {0,1}]
  %s2 = sld [smem:[#allocation0]]
  $region18: #{tpu_custom_call.1} parent=0
    _
  %s4 = ssub.s32 1, %s2
  %s5 = scalar_select 0, %s4, %s2
  $region1: #{tpu_custom_call.1} parent=0
    #allocation2 [shape = 'u8[8192]{0}', space=vmem, size = 0x2000, scoped, tag = 'input window, operand 0, single buffered']
    #allocation3 [shape = 's32[1]{0}', space=sflag, size = 0x4, scoped, tag = 'scoped memory for tpu_custom_call.1']
    #allocation4 [shape = 's32[1]{0}', space=sflag, size = 0x4, scoped, tag = 'scoped memory for tpu_custom_call.1']
    #allocation5 [shape = 'u8[8192]{0}', space=vmem, size = 0x2000, scoped, tag = 'output window, operand 0, single buffered']
    %6 = vsyncpa [#allocation3], 0
    %7 = vsyncpa [#allocation4], 0
    // Predicated region
    $region2: #{tpu_custom_call.1} parent=1 // pred_check
      _
    $region3: #{tpu_custom_call.1} parent=1 // pred_check_branch
      %9 = sbr.rel (0) target = $region5
    $region4: #{tpu_custom_call.1} parent=1 // pred_region
      %s11 = ssub.s32 256, 256
      %12 = vsyncadd [#allocation3], %s11
      %s14 = sshll.u32 [#allocation2], 4
      %s15 = int_to_ptr.vmem [resolvable:$true] %s14
      %17 = dma.hbm_to_vmem [thread:$0]  %s0, 256, %s15, [#allocation3]
    $region5: #{tpu_custom_call.1} parent=1 // pred_fallthru
      _
    // Predicated region
    $region6: #{tpu_custom_call.1} parent=1 // pred_check
      _
    $region7: #{tpu_custom_call.1} parent=1 // pred_check_branch
      %19 = sbr.rel (0) target = $region9
    $region8: #{tpu_custom_call.1} parent=1 // pred_region
      %20 = dma.done [#allocation3], 256
    $region9: #{tpu_custom_call.1} parent=1 // pred_fallthru
      _
    %v21 = vld [vmem:[#allocation2] sm:$0xff]
    %v22 = vld [vmem:[#allocation2 + $0x8] sm:$0xff]
    %v23 = vadd.f32 %v21, 1.0
    %v24 = vadd.f32 %v22, 1.0
    %25 = vst [vmem:[#allocation5] sm:$0xff] %v23
    %26 = vst [vmem:[#allocation5 + $0x8] sm:$0xff] %v24
    // Predicated region
    $region10: #{tpu_custom_call.1} parent=1 // pred_check
      _
    $region11: #{tpu_custom_call.1} parent=1 // pred_check_branch
      %28 = sbr.rel (0) target = $region13
    $region12: #{tpu_custom_call.1} parent=1 // pred_region
      %s30 = ssub.s32 256, 256
      %31 = vsyncadd [#allocation4], %s30
      %s33 = sshll.u32 [#allocation5], 4
      %s34 = int_to_ptr.vmem [resolvable:$true] %s33
      %36 = dma.vmem_to_hbm [thread:$0]  %s34, 256, %s1, [#allocation4]
    $region13: #{tpu_custom_call.1} parent=1 // pred_fallthru
      _
    // Predicated region
    $region14: #{tpu_custom_call.1} parent=1 // pred_check
      _
    $region15: #{tpu_custom_call.1} parent=1 // pred_check_branch
      %38 = sbr.rel (0) target = $region17
    $region16: #{tpu_custom_call.1} parent=1 // pred_region
      %39 = dma.done [#allocation4], 256
    $region17: #{tpu_custom_call.1} parent=1 // pred_fallthru
      _
    %40 = vsyncpa [#allocation3], 1
    %41 = vsyncpa [#allocation4], 1

</llo_original>
